<compile_context>
chip_gen: v7x
topology: tpu7x:2x2x1
jax: 0.10.0
libtpu: 0.0.40
codegen_flags: <defaults>
</compile_context>

<pallas_src>
import jax
import jax.numpy as jnp
from jax.experimental import pallas as pl
from jax.experimental.pallas import tpu as pltpu

LANE = 128
SUBLANE = 8
BN_EPS = 1e-5


def _round_up(x, m):
    return ((x + m - 1) // m) * m


def _cdiv(a, b):
    return (a + b - 1) // b


def _make_kernel(num_layers, pack, out_eff):
    """num_layers = number of Linear layers (hidden layers + final layer).

    pack   = how many batch rows are packed into one 128-lane output row.
    out_eff= lanes reserved per batch row in the packed output (divides 128)."""

    def kernel(x_ref, *refs):
        out_ref = refs[-1]
        wb = refs[:-1]
        h = x_ref[...]
        # Hidden layers: fused (BN-folded) Linear + bias + ReLU (feature dims 128-padded).
        for l in range(num_layers - 1):
            w = wb[2 * l][...]
            b = wb[2 * l + 1][...]
            h = jnp.dot(h, w, preferred_element_type=jnp.float32) + b
            h = jnp.maximum(h, 0.0)
        # Final Linear (lane-padded) + softmax.  Padded logit lanes carry a -1e9 bias,
        # so exp() underflows to exactly 0 there and the softmax equals the true one.
        w = wb[2 * (num_layers - 1)][...]
        b = wb[2 * (num_layers - 1) + 1][...]
        logits = jnp.dot(h, w, preferred_element_type=jnp.float32) + b
        m = jnp.max(logits, axis=-1, keepdims=True)
        e = jnp.exp(logits - m)
        s = jnp.sum(e, axis=-1, keepdims=True)
        probs = e * (1.0 / s)  # one exact reciprocal per row + broadcast multiply

        if pack > 1:
            # Lane-pack `pack` consecutive batch rows into one 128-lane output row:
            # row (g*pack + j)'s probs (lanes [0, out_eff), rest exactly 0) are rotated
            # to lanes [j*out_eff, (j+1)*out_eff) and the group of `pack` rows summed.
            t, lanes = probs.shape
            rolled = pltpu.roll(probs, shift=0, axis=1,
                                stride=out_eff, stride_axis=0)
            packed = jnp.sum(rolled.reshape(t // pack, pack, lanes), axis=1)
            out_ref[...] = packed.astype(out_ref.dtype)
        else:
            out_ref[...] = probs.astype(out_ref.dtype)

    return kernel


def _prepare(params):
    """Fold eval-mode BatchNorm into the following Linear, zero-pad hidden feature
    dims to multiples of 128, and lane-pad the final layer. Runs once (host side)."""
    num_layers = len(params)
    in_dim = params[0]["w"].shape[0]
    out_dim = params[-1]["w"].shape[1]

    if out_dim <= LANE:
        out_eff = 1
        while out_eff < out_dim:
            out_eff *= 2              # smallest power of two (divisor of 128) >= out_dim
        pack = LANE // out_eff        # batch rows packed per 128-lane output row
        slab = LANE
    else:
        out_eff = _round_up(out_dim, LANE)
        pack = 1
        slab = out_eff

    flat = []
    pend_s = None  # pending BN scale from previous hidden layer
    pend_t = None  # pending BN shift from previous hidden layer
    prev_pad = in_dim
    for i, layer in enumerate(params):
        w, b = layer["w"], layer["b"]
        if pend_s is not None:
            b = b + pend_t @ w        # uses the *original* W
            w = pend_s[:, None] * w
        # Pad input-feature rows up to the previous layer's padded width (zeros).
        if w.shape[0] < prev_pad:
            w = jnp.pad(w, ((0, prev_pad - w.shape[0]), (0, 0)))
        if i < num_layers - 1:
            h_true = w.shape[1]
            h_pad = _round_up(h_true, LANE)
            w = jnp.pad(w, ((0, 0), (0, h_pad - h_true)))
            b = jnp.pad(b, (0, h_pad - h_true))
            flat += [w, b.reshape(1, -1)]
            s = layer["gamma"] / jnp.sqrt(layer["var"] + BN_EPS)
            pend_s = s
            pend_t = layer["beta"] - layer["mean"] * s
            prev_pad = h_pad
        else:
            # Final layer: zero-pad weight lanes, pad bias lanes with -1e9.
            w = jnp.pad(w, ((0, 0), (0, slab - out_dim)))
            b = jnp.pad(b.reshape(1, -1), ((0, 0), (0, slab - out_dim)),
                        constant_values=-1e9)
            flat += [w, b]

    meta = dict(in_dim=in_dim, out_dim=out_dim, out_eff=out_eff,
                pack=pack, slab=slab, num_layers=num_layers)
    return tuple(flat), meta


def make_forward(params, *, batch_tile_cap=2048):
    """Returns a jitted forward: x [B, input_dim] -> softmax probs [B, output_dim]."""
    flat, meta = _prepare(params)
    in_dim = meta["in_dim"]
    out_dim = meta["out_dim"]
    out_eff = meta["out_eff"]
    pack = meta["pack"]
    slab = meta["slab"]
    num_layers = meta["num_layers"]
    unit = SUBLANE * pack            # batch-tile granularity (keeps all blocks well-formed)
    kernel = _make_kernel(num_layers, pack, out_eff)

    @jax.jit
    def fwd(x, *flat_args):
        B = x.shape[0]
        cap = max(int(batch_tile_cap), unit)
        cap -= cap % unit
        bp_min = _round_up(B, unit)
        if bp_min <= cap:
            # One fat tile (fewest, fattest steps for v5e/v6e single-TC).
            n_steps = 1
            batch_tile = bp_min
        else:
            # Multi-tile: even step count so the parallel axis shards across
            # both v7x TensorCores; tiles stay as fat as the cap allows.
            n_steps = _cdiv(bp_min, cap)
            if n_steps % 2:
                n_steps += 1
            batch_tile = _round_up(_cdiv(bp_min, n_steps), unit)
        Bp = batch_tile * n_steps
        xp = x if Bp == B else jnp.pad(x, ((0, Bp - B), (0, 0)))

        out_rows = Bp // pack
        tile_out_rows = batch_tile // pack

        in_specs = [pl.BlockSpec((batch_tile, in_dim), lambda i: (i, 0))]
        # Constant index_map -> weights/biases stay VMEM-resident across steps.
        in_specs += [pl.BlockSpec(a.shape, lambda i: (0, 0)) for a in flat_args]
        out_specs = pl.BlockSpec((tile_out_rows, slab), lambda i: (i, 0))

        # VMEM budget from actual tile / weight sizes (+ generous margin).
        io_bytes = 2 * (batch_tile * in_dim * 4 + tile_out_rows * slab * 4)
        io_bytes += 2 * sum(int(a.size) * 4 for a in flat_args)
        vmem_limit = int(min(max(2 * io_bytes + (16 << 20), 32 << 20), 64 << 20))

        out = pl.pallas_call(
            kernel,
            out_shape=jax.ShapeDtypeStruct((out_rows, slab), jnp.float32),
            grid_spec=pltpu.PrefetchScalarGridSpec(
                num_scalar_prefetch=0,
                grid=(n_steps,),
                in_specs=in_specs,
                out_specs=out_specs,
            ),
            compiler_params=pltpu.CompilerParams(
                dimension_semantics=("parallel",),
                vmem_limit_bytes=vmem_limit,
            ),
        )(xp, *flat_args)

        # Lane-packed (row-major) output -> pure metadata reshape + cheap slice.
        return out.reshape(Bp, slab // pack)[:B, :out_dim]

    return lambda x: fwd(x, *flat)


def process_allocation_forward(x, params, **kw):
    """Convenience one-shot API (prefer make_forward() to amortize the prep)."""
    return make_forward(params, **kw)(x)


def init_params(key, input_dim, hidden_dims, output_dim):
    """PyTorch-Linear-style init; weights stored as [in_features, out_features].
    Hidden layers also carry BatchNorm1d eval-mode parameters/statistics."""
    n_keys = 6 * len(hidden_dims) + 2
    keys = iter(jax.random.split(key, n_keys))

    def lin(fan_in, fan_out):
        bound = 1.0 / jnp.sqrt(float(fan_in))
        w = jax.random.uniform(next(keys), (fan_in, fan_out), jnp.float32, -bound, bound)
        b = jax.random.uniform(next(keys), (fan_out,), jnp.float32, -bound, bound)
        return w, b

    params = []
    prev = input_dim
    for h in hidden_dims:
        w, b = lin(prev, h)
        gamma = jax.random.uniform(next(keys), (h,), jnp.float32, 0.8, 1.2)
        beta = 0.1 * jax.random.normal(next(keys), (h,), jnp.float32)
        mean = 0.1 * jax.random.normal(next(keys), (h,), jnp.float32)
        var = jax.random.uniform(next(keys), (h,), jnp.float32, 0.5, 1.5)
        params.append(dict(w=w, b=b, gamma=gamma, beta=beta, mean=mean, var=var))
        prev = h
    w, b = lin(prev, output_dim)
    params.append(dict(w=w, b=b))
    return params


def _reference_forward(x, params):
    """Pure-JAX reference matching the PyTorch module in eval mode."""
    h = x
    for layer in params[:-1]:
        h = h @ layer["w"] + layer["b"]                       # Linear
        h = jnp.maximum(h, 0.0)                               # ReLU
        h = (h - layer["mean"]) / jnp.sqrt(layer["var"] + BN_EPS) \
            * layer["gamma"] + layer["beta"]                  # BatchNorm1d (eval)
        # Dropout(0.2): identity at inference.
    logits = h @ params[-1]["w"] + params[-1]["b"]
    return jax.nn.softmax(logits, axis=1)


if __name__ == "__main__":
    input_dim = 32
    hidden_dims = [64, 32]
    output_dim = 8

    key = jax.random.PRNGKey(0)
    kx1, kx2, kp = jax.random.split(key, 3)
    params = init_params(kp, input_dim, hidden_dims, output_dim)

    # Case 1: small batch -> single fat tile (grid = 1).
    x1 = jax.random.normal(kx1, (64, input_dim), dtype=jnp.float32)
    fwd = make_forward(params)                    # default 2048-row tile cap
    p1 = jax.block_until_ready(fwd(x1))
    r1 = _reference_forward(x1, params)
    assert p1.shape == (64, output_dim)
    assert jnp.allclose(jnp.sum(p1, axis=1), 1.0, atol=1e-5)
    assert jnp.allclose(p1, r1, atol=2e-5, rtol=1e-4), float(jnp.max(jnp.abs(p1 - r1)))

    # Case 2: forced small cap -> multi-tile grid with an EVEN number of steps
    # (exercises the v7x two-TensorCore sharding path).
    x2 = jax.random.normal(kx2, (200, input_dim), dtype=jnp.float32)
    fwd_small = make_forward(params, batch_tile_cap=128)
    p2 = jax.block_until_ready(fwd_small(x2))
    r2 = _reference_forward(x2, params)
    assert p2.shape == (200, output_dim)
    assert jnp.allclose(jnp.sum(p2, axis=1), 1.0, atol=1e-5)
    assert jnp.allclose(p2, r2, atol=2e-5, rtol=1e-4), float(jnp.max(jnp.abs(p2 - r2)))

    # TODO(synk): training-mode BatchNorm (batch statistics) and stochastic Dropout
    # are not implemented; this kernel is inference-only.
    print("KERNEL_OK")
</pallas_src>

<mosaic_0001>
module attributes {stable_mosaic.version = 11 : i64} {
  func.func @kernel(%arg0: i32, %arg1: memref<128x32xf32, #tpu.memory_space<vmem>>, %arg2: memref<32x128xf32, #tpu.memory_space<vmem>>, %arg3: memref<1x128xf32, #tpu.memory_space<vmem>>, %arg4: memref<128x128xf32, #tpu.memory_space<vmem>>, %arg5: memref<1x128xf32, #tpu.memory_space<vmem>>, %arg6: memref<128x128xf32, #tpu.memory_space<vmem>>, %arg7: memref<1x128xf32, #tpu.memory_space<vmem>>, %arg8: memref<8x128xf32, #tpu.memory_space<vmem>>) attributes {dimension_semantics = [#tpu.dimension_semantics<parallel>], iteration_bounds = array<i64: 1>, scalar_prefetch = 0 : i64, scratch_operands = 0 : i64, tpu.core_type = #tpu.core_type<tc>, window_params = [{transform_indices = @transform_0, window_bounds = array<i64: 128, 32>}, {pipeline_mode = #tpu.pipeline_mode<synchronous>, transform_indices = @transform_1, window_bounds = array<i64: 32, 128>}, {pipeline_mode = #tpu.pipeline_mode<synchronous>, transform_indices = @transform_2, window_bounds = array<i64: 1, 128>}, {pipeline_mode = #tpu.pipeline_mode<synchronous>, transform_indices = @transform_3, window_bounds = array<i64: 128, 128>}, {pipeline_mode = #tpu.pipeline_mode<synchronous>, transform_indices = @transform_4, window_bounds = array<i64: 1, 128>}, {pipeline_mode = #tpu.pipeline_mode<synchronous>, transform_indices = @transform_5, window_bounds = array<i64: 128, 128>}, {pipeline_mode = #tpu.pipeline_mode<synchronous>, transform_indices = @transform_6, window_bounds = array<i64: 1, 128>}, {transform_indices = @transform_7, window_bounds = array<i64: 8, 128>}]} {
    %c0 = arith.constant 0 : index
    %c0_0 = arith.constant 0 : index
    %0 = vector.load %arg1[%c0, %c0_0] : memref<128x32xf32, #tpu.memory_space<vmem>>, vector<128x32xf32>
    %c0_1 = arith.constant 0 : index
    %c0_2 = arith.constant 0 : index
    %1 = vector.load %arg2[%c0_1, %c0_2] : memref<32x128xf32, #tpu.memory_space<vmem>>, vector<32x128xf32>
    %c0_3 = arith.constant 0 : index
    %c0_4 = arith.constant 0 : index
    %2 = vector.load %arg3[%c0_3, %c0_4] : memref<1x128xf32, #tpu.memory_space<vmem>>, vector<1x128xf32>
    %cst = arith.constant dense<0.000000e+00> : vector<128x128xf32>
    %3 = tpu.matmul %0, %1, %cst {dimension_numbers = #tpu.dot_dimension_numbers<[1], [0], [0], [1], [0, 0, 1, 1], [], []>} : vector<128x32xf32>, vector<32x128xf32>, vector<128x128xf32> -> vector<128x128xf32>
    %4 = vector.broadcast %2 : vector<1x128xf32> to vector<128x128xf32>
    %5 = arith.addf %3, %4 : vector<128x128xf32>
    %cst_5 = arith.constant 0.000000e+00 : f32
    %6 = vector.broadcast %cst_5 : f32 to vector<128x128xf32>
    %7 = arith.maximumf %5, %6 : vector<128x128xf32>
    %c0_6 = arith.constant 0 : index
    %c0_7 = arith.constant 0 : index
    %8 = vector.load %arg4[%c0_6, %c0_7] : memref<128x128xf32, #tpu.memory_space<vmem>>, vector<128x128xf32>
    %c0_8 = arith.constant 0 : index
    %c0_9 = arith.constant 0 : index
    %9 = vector.load %arg5[%c0_8, %c0_9] : memref<1x128xf32, #tpu.memory_space<vmem>>, vector<1x128xf32>
    %cst_10 = arith.constant dense<0.000000e+00> : vector<128x128xf32>
    %10 = tpu.matmul %7, %8, %cst_10 {dimension_numbers = #tpu.dot_dimension_numbers<[1], [0], [0], [1], [0, 0, 1, 1], [], []>} : vector<128x128xf32>, vector<128x128xf32>, vector<128x128xf32> -> vector<128x128xf32>
    %11 = vector.broadcast %9 : vector<1x128xf32> to vector<128x128xf32>
    %12 = arith.addf %10, %11 : vector<128x128xf32>
    %cst_11 = arith.constant 0.000000e+00 : f32
    %13 = vector.broadcast %cst_11 : f32 to vector<128x128xf32>
    %14 = arith.maximumf %12, %13 : vector<128x128xf32>
    %c0_12 = arith.constant 0 : index
    %c0_13 = arith.constant 0 : index
    %15 = vector.load %arg6[%c0_12, %c0_13] : memref<128x128xf32, #tpu.memory_space<vmem>>, vector<128x128xf32>
    %c0_14 = arith.constant 0 : index
    %c0_15 = arith.constant 0 : index
    %16 = vector.load %arg7[%c0_14, %c0_15] : memref<1x128xf32, #tpu.memory_space<vmem>>, vector<1x128xf32>
    %cst_16 = arith.constant dense<0.000000e+00> : vector<128x128xf32>
    %17 = tpu.matmul %14, %15, %cst_16 {dimension_numbers = #tpu.dot_dimension_numbers<[1], [0], [0], [1], [0, 0, 1, 1], [], []>} : vector<128x128xf32>, vector<128x128xf32>, vector<128x128xf32> -> vector<128x128xf32>
    %18 = vector.broadcast %16 : vector<1x128xf32> to vector<128x128xf32>
    %19 = arith.addf %17, %18 : vector<128x128xf32>
    %cst_17 = arith.constant dense<0xFF800000> : vector<128xf32>
    %20 = vector.multi_reduction <maximumf>, %19, %cst_17 [1] : vector<128x128xf32> to vector<128xf32>
    %21 = vector.shape_cast %20 : vector<128xf32> to vector<128x1xf32>
    %22 = vector.broadcast %21 : vector<128x1xf32> to vector<128x128xf32>
    %23 = arith.subf %19, %22 : vector<128x128xf32>
    %24 = math.exp %23 : vector<128x128xf32>
    %cst_18 = arith.constant dense<0.000000e+00> : vector<128xf32>
    %25 = vector.multi_reduction <add>, %24, %cst_18 [1] : vector<128x128xf32> to vector<128xf32>
    %26 = vector.shape_cast %25 : vector<128xf32> to vector<128x1xf32>
    %cst_19 = arith.constant 1.000000e+00 : f32
    %27 = vector.broadcast %cst_19 : f32 to vector<128x1xf32>
    %28 = arith.divf %27, %26 : vector<128x1xf32>
    %29 = vector.broadcast %28 : vector<128x1xf32> to vector<128x128xf32>
    %30 = arith.mulf %24, %29 : vector<128x128xf32>
    %c0_i32 = arith.constant 0 : i32
    %31 = tpu.dynamic_rotate %30 by %c0_i32 dim 1 {stride = 8 : si32, stride_dimension = 0 : si32} : vector<128x128xf32>, i32 -> vector<128x128xf32>
    %32 = vector.shape_cast %31 : vector<128x128xf32> to vector<8x16x128xf32>
    %cst_20 = arith.constant dense<0.000000e+00> : vector<8x128xf32>
    %33 = vector.multi_reduction <add>, %32, %cst_20 [1] : vector<8x16x128xf32> to vector<8x128xf32>
    %c0_21 = arith.constant 0 : index
    %c0_22 = arith.constant 0 : index
    %34 = vector.load %arg8[%c0_21, %c0_22] : memref<8x128xf32, #tpu.memory_space<vmem>>, vector<8x128xf32>
    tpu.vector_store %arg8[%c0_21, %c0_22], %33 {strides = array<i32>} : memref<8x128xf32, #tpu.memory_space<vmem>>, vector<8x128xf32>,
    return
  }
  func.func @transform_0(%arg0: i32) -> (i32, i32) {
    %c0_i32 = arith.constant 0 : i32
    %c0_i32_0 = arith.constant 0 : i32
    return %arg0, %c0_i32 : i32, i32
  }
  func.func @transform_1(%arg0: i32) -> (i32, i32) {
    %c0_i32 = arith.constant 0 : i32
    %c0_i32_0 = arith.constant 0 : i32
    %c0_i32_1 = arith.constant 0 : i32
    return %c0_i32, %c0_i32_0 : i32, i32
  }
  func.func @transform_2(%arg0: i32) -> (i32, i32) {
    %c0_i32 = arith.constant 0 : i32
    %c0_i32_0 = arith.constant 0 : i32
    %c0_i32_1 = arith.constant 0 : i32
    return %c0_i32, %c0_i32_0 : i32, i32
  }
  func.func @transform_3(%arg0: i32) -> (i32, i32) {
    %c0_i32 = arith.constant 0 : i32
    %c0_i32_0 = arith.constant 0 : i32
    %c0_i32_1 = arith.constant 0 : i32
    return %c0_i32, %c0_i32_0 : i32, i32
  }
  func.func @transform_4(%arg0: i32) -> (i32, i32) {
    %c0_i32 = arith.constant 0 : i32
    %c0_i32_0 = arith.constant 0 : i32
    %c0_i32_1 = arith.constant 0 : i32
    return %c0_i32, %c0_i32_0 : i32, i32
  }
  func.func @transform_5(%arg0: i32) -> (i32, i32) {
    %c0_i32 = arith.constant 0 : i32
    %c0_i32_0 = arith.constant 0 : i32
    %c0_i32_1 = arith.constant 0 : i32
    return %c0_i32, %c0_i32_0 : i32, i32
  }
  func.func @transform_6(%arg0: i32) -> (i32, i32) {
    %c0_i32 = arith.constant 0 : i32
    %c0_i32_0 = arith.constant 0 : i32
    %c0_i32_1 = arith.constant 0 : i32
    return %c0_i32, %c0_i32_0 : i32, i32
  }
  func.func @transform_7(%arg0: i32) -> (i32, i32) {
    %c0_i32 = arith.constant 0 : i32
    %c0_i32_0 = arith.constant 0 : i32
    return %arg0, %c0_i32 : i32, i32
  }
}

</mosaic_0001>

<llo_original>
// kernel: fwd.1
$region0: #{fwd.1}
  #allocation0 [shape = 'u32[]', space=smem, size = 0x4, offset = 0x4, fixed_abs, tag = 'smem constant byte address 0x4 - core index']
  #allocation1 [shape = 'u32[144,128]{1,0:T(1,128)}', space=vmem, size = 0x12000, scoped, tag = 'internal scratch']
  %s0 = inlined_call_operand.vmem [shape: f32[128,32], index: 0, kind: input, shape index: {}]
  %s1 = inlined_call_operand.vmem [shape: f32[32,128], index: 1, kind: input, shape index: {}]
  %s2 = inlined_call_operand.vmem [shape: f32[1,128], index: 2, kind: input, shape index: {}]
  %s3 = inlined_call_operand.vmem [shape: f32[128,128], index: 3, kind: input, shape index: {}]
  %s4 = inlined_call_operand.vmem [shape: f32[1,128], index: 4, kind: input, shape index: {}]
  %s5 = inlined_call_operand.vmem [shape: f32[128,128], index: 5, kind: input, shape index: {}]
  %s6 = inlined_call_operand.vmem [shape: f32[1,128], index: 6, kind: input, shape index: {}]
  %s7 = inlined_call_operand.vmem [shape: f32[8,128], index: 7, kind: output, shape index: {}]
  %s8 = sld [smem:[#allocation0]]
  $region38: #{fwd.1} parent=0
    _
  %s10 = ssub.s32 1, %s8
  %s11 = scalar_select 0, %s10, %s8
  // Predicated region
  $region2: #{fwd.1} parent=0 // pred_check
    _
  $region3: #{fwd.1} parent=0 // pred_check_branch
    %13 = sbr.rel (0) target = $region5
  $region4: #{fwd.1} parent=0 // pred_region
    _
  $region5: #{fwd.1} parent=0 // pred_fallthru
    _
  // Predicated region
  $region6: #{fwd.1} parent=0 // pred_check
    _
  $region7: #{fwd.1} parent=0 // pred_check_branch
    %15 = sbr.rel (0) target = $region9
  $region8: #{fwd.1} parent=0 // pred_region
    _
  $region9: #{fwd.1} parent=0 // pred_fallthru
    _
  // Predicated region
  $region10: #{fwd.1} parent=0 // pred_check
    _
  $region11: #{fwd.1} parent=0 // pred_check_branch
    %17 = sbr.rel (0) target = $region13
  $region12: #{fwd.1} parent=0 // pred_region
    _
  $region13: #{fwd.1} parent=0 // pred_fallthru
    _
  // Predicated region
  $region14: #{fwd.1} parent=0 // pred_check
    _
  $region15: #{fwd.1} parent=0 // pred_check_branch
    %19 = sbr.rel (0) target = $region17
  $region16: #{fwd.1} parent=0 // pred_region
    _
  $region17: #{fwd.1} parent=0 // pred_fallthru
    _
  // Predicated region
  $region18: #{fwd.1} parent=0 // pred_check
    _
  $region19: #{fwd.1} parent=0 // pred_check_branch
    %21 = sbr.rel (0) target = $region21
  $region20: #{fwd.1} parent=0 // pred_region
    _
  $region21: #{fwd.1} parent=0 // pred_fallthru
    _
  // Predicated region
  $region22: #{fwd.1} parent=0 // pred_check
    _
  $region23: #{fwd.1} parent=0 // pred_check_branch
    %23 = sbr.rel (0) target = $region25
  $region24: #{fwd.1} parent=0 // pred_region
    _
  $region25: #{fwd.1} parent=0 // pred_fallthru
    _
  // Predicated region
  $region26: #{fwd.1} parent=0 // pred_check
    _
  $region27: #{fwd.1} parent=0 // pred_check_branch
    %25 = sbr.rel (0) target = $region29
  $region28: #{fwd.1} parent=0 // pred_region
    _
  $region29: #{fwd.1} parent=0 // pred_fallthru
    _
  %v26 = vld [vmem:[%s0] sm:$0xff]
  %v27 = vld [vmem:[%s0 + $0x8] sm:$0xff]
  %v28 = vld [vmem:[%s0 + $0x10] sm:$0xff]
  %v29 = vld [vmem:[%s0 + $0x18] sm:$0xff]
  %v30 = vld [vmem:[%s0 + $0x20] sm:$0xff]
  %v31 = vld [vmem:[%s0 + $0x28] sm:$0xff]
  %v32 = vld [vmem:[%s0 + $0x30] sm:$0xff]
  %v33 = vld [vmem:[%s0 + $0x38] sm:$0xff]
  %v34 = vld [vmem:[%s0 + $0x40] sm:$0xff]
  %v35 = vld [vmem:[%s0 + $0x48] sm:$0xff]
  %v36 = vld [vmem:[%s0 + $0x50] sm:$0xff]
  %v37 = vld [vmem:[%s0 + $0x58] sm:$0xff]
  %v38 = vld [vmem:[%s0 + $0x60] sm:$0xff]
  %v39 = vld [vmem:[%s0 + $0x68] sm:$0xff]
  %v40 = vld [vmem:[%s0 + $0x70] sm:$0xff]
  %v41 = vld [vmem:[%s0 + $0x78] sm:$0xff]
  %v42 = vld [vmem:[%s1] sm:$0xff]
  %v43 = vld [vmem:[%s1 + $0x8] sm:$0xff]
  %v44 = vld [vmem:[%s1 + $0x10] sm:$0xff]
  %v45 = vld [vmem:[%s1 + $0x18] sm:$0xff]
  %v46 = vld [vmem:[%s2] sm:$0x1]
  %v48 = vlaneseq
  %v49 = vshrl.u32 %v48, 7
  %v50 = vsub.s32 0, %v49
  %v51 = vrot.slane %v46, %v50
  %vm53 = vcmask 261120
  %v55 = vsel %vm53, %v26, 0
  %v58 = vsel %vm53, %v27, 0
  %v61 = vsel %vm53, %v28, 0
  %v64 = vsel %vm53, %v29, 0
  %v67 = vsel %vm53, %v30, 0
  %v70 = vsel %vm53, %v31, 0
  %v73 = vsel %vm53, %v32, 0
  %v76 = vsel %vm53, %v33, 0
  %v79 = vsel %vm53, %v34, 0
  %v82 = vsel %vm53, %v35, 0
  %v85 = vsel %vm53, %v36, 0
  %v88 = vsel %vm53, %v37, 0
  %v91 = vsel %vm53, %v38, 0
  %v94 = vsel %vm53, %v39, 0
  %v97 = vsel %vm53, %v40, 0
  %v100 = vsel %vm53, %v41, 0
  %102 = vmatprep.subr.mxu0 0.0
  %103 = vmatpush1.msra.mxu0 %v42
  %104 = vmatprep.subr.mxu0 0.0
  %105 = vmatpush1.msra.mxu0 %v43
  %106 = vmatprep.subr.mxu0 0.0
  %107 = vmatpush1.msra.mxu0 %v44
  %108 = vmatprep.subr.mxu0 0.0
  %109 = vmatpush1.msra.mxu0 %v45
  %110 = vmatprep.subr.mxu0 0.0
  %111 = vmatpush1.msra.mxu0 0.0
  %112 = vmatprep.subr.mxu0 0.0
  %113 = vmatpush1.msra.mxu0 0.0
  %114 = vmatprep.subr.mxu0 0.0
  %115 = vmatpush1.msra.mxu0 0.0
  %116 = vmatprep.subr.mxu0 0.0
  %117 = vmatpush1.msra.mxu0 0.0
  %118 = vmatprep.subr.mxu0 0.0
  %119 = vmatpush1.msra.mxu0 0.0
  %120 = vmatprep.subr.mxu0 0.0
  %121 = vmatpush1.msra.mxu0 0.0
  %122 = vmatprep.subr.mxu0 0.0
  %123 = vmatpush1.msra.mxu0 0.0
  %124 = vmatprep.subr.mxu0 0.0
  %125 = vmatpush1.msra.mxu0 0.0
  %126 = vmatprep.subr.mxu0 0.0
  %127 = vmatpush1.msra.mxu0 0.0
  %128 = vmatprep.subr.mxu0 0.0
  %129 = vmatpush1.msra.mxu0 0.0
  %130 = vmatprep.subr.mxu0 0.0
  %131 = vmatpush1.msra.mxu0 0.0
  %132 = vmatprep.subr.mxu0 0.0
  %133 = vmatpush1.msra.mxu0 0.0
  %134 = vmatprep.subr.mxu0 0.0
  %135 = vmatpush1.msra.mxu0 0.0
  %136 = vmatprep.subr.mxu0 0.0
  %137 = vmatpush1.msra.mxu0 0.0
  %138 = vmatprep.subr.mxu0 0.0
  %139 = vmatpush1.msra.mxu0 0.0
  %140 = vmatprep.subr.mxu0 0.0
  %141 = vmatpush1.msra.mxu0 0.0
  %142 = vmatprep.subr.mxu0 0.0
  %143 = vmatpush1.msra.mxu0 0.0
  %144 = vmatprep.subr.mxu0 0.0
  %145 = vmatpush1.msra.mxu0 0.0
  %146 = vmatprep.subr.mxu0 0.0
  %147 = vmatpush1.msra.mxu0 0.0
  %148 = vmatprep.subr.mxu0 0.0
  %149 = vmatpush1.msra.mxu0 0.0
  %150 = vmatprep.subr.mxu0 0.0
  %151 = vmatpush1.msra.mxu0 0.0
  %152 = vmatprep.subr.mxu0 0.0
  %153 = vmatpush1.msra.mxu0 0.0
  %154 = vmatprep.subr.mxu0 0.0
  %155 = vmatpush1.msra.mxu0 0.0
  %156 = vmatprep.subr.mxu0 0.0
  %157 = vmatpush1.msra.mxu0 0.0
  %158 = vmatprep.subr.mxu0 0.0
  %159 = vmatpush1.msra.mxu0 0.0
  %160 = vmatprep.subr.mxu0 0.0
  %161 = vmatpush1.msra.mxu0 0.0
  %162 = vmatprep.subr.mxu0 0.0
  %163 = vmatpush1.msra.mxu0 0.0
  %164 = vmatprep.subr.mxu0 0.0
  %165 = vmatpush1.msra.mxu0 0.0
  %166 = vmatprep.mubr.f32.mxu0 0.0
  %167 = vmatmul.mubr.f32.gmra.mrb[0].mxu0 %v55
  %v168 = vpop.f32.mrb[0].mxu0
  %v169 = vadd.f32 %v51, %v168
  %v170 = vpop.f32.mrb[0].mxu0
  %171 = vmatprep.mubr.f32.mxu0 0.0
  %172 = vmatmul.mubr.f32.gmra.mrb[0].mxu0 %v58
  %v173 = vpop.f32.mrb[0].mxu0
  %v174 = vadd.f32 %v51, %v173
  %v175 = vpop.f32.mrb[0].mxu0
  %176 = vmatprep.mubr.f32.mxu0 0.0
  %177 = vmatmul.mubr.f32.gmra.mrb[0].mxu0 %v61
  %v178 = vpop.f32.mrb[0].mxu0
  %v179 = vadd.f32 %v51, %v178
  %v180 = vpop.f32.mrb[0].mxu0
  %181 = vmatprep.mubr.f32.mxu0 0.0
  %182 = vmatmul.mubr.f32.gmra.mrb[0].mxu0 %v64
  %v183 = vpop.f32.mrb[0].mxu0
  %v184 = vadd.f32 %v51, %v183
  %v185 = vpop.f32.mrb[0].mxu0
  %186 = vmatprep.mubr.f32.mxu0 0.0
  %187 = vmatmul.mubr.f32.gmra.mrb[0].mxu0 %v67
  %v188 = vpop.f32.mrb[0].mxu0
  %v189 = vadd.f32 %v51, %v188
  %v190 = vpop.f32.mrb[0].mxu0
  %191 = vmatprep.mubr.f32.mxu0 0.0
  %192 = vmatmul.mubr.f32.gmra.mrb[0].mxu0 %v70
  %v193 = vpop.f32.mrb[0].mxu0
  %v194 = vadd.f32 %v51, %v193
  %v195 = vpop.f32.mrb[0].mxu0
  %196 = vmatprep.mubr.f32.mxu0 0.0
  %197 = vmatmul.mubr.f32.gmra.mrb[0].mxu0 %v73
  %v198 = vpop.f32.mrb[0].mxu0
  %v199 = vadd.f32 %v51, %v198
  %v200 = vpop.f32.mrb[0].mxu0
  %201 = vmatprep.mubr.f32.mxu0 0.0
  %202 = vmatmul.mubr.f32.gmra.mrb[0].mxu0 %v76
  %v203 = vpop.f32.mrb[0].mxu0
  %v204 = vadd.f32 %v51, %v203
  %v205 = vpop.f32.mrb[0].mxu0
  %206 = vmatprep.mubr.f32.mxu0 0.0
  %207 = vmatmul.mubr.f32.gmra.mrb[0].mxu0 %v79
  %v208 = vpop.f32.mrb[0].mxu0
  %v209 = vadd.f32 %v51, %v208
  %v210 = vpop.f32.mrb[0].mxu0
  %211 = vmatprep.mubr.f32.mxu0 0.0
  %212 = vmatmul.mubr.f32.gmra.mrb[0].mxu0 %v82
  %v213 = vpop.f32.mrb[0].mxu0
  %v214 = vadd.f32 %v51, %v213
  %v215 = vpop.f32.mrb[0].mxu0
  %216 = vmatprep.mubr.f32.mxu0 0.0
  %217 = vmatmul.mubr.f32.gmra.mrb[0].mxu0 %v85
  %v218 = vpop.f32.mrb[0].mxu0
  %v219 = vadd.f32 %v51, %v218
  %v220 = vpop.f32.mrb[0].mxu0
  %221 = vmatprep.mubr.f32.mxu0 0.0
  %222 = vmatmul.mubr.f32.gmra.mrb[0].mxu0 %v88
  %v223 = vpop.f32.mrb[0].mxu0
  %v224 = vadd.f32 %v51, %v223
  %v225 = vpop.f32.mrb[0].mxu0
  %226 = vmatprep.mubr.f32.mxu0 0.0
  %227 = vmatmul.mubr.f32.gmra.mrb[0].mxu0 %v91
  %v228 = vpop.f32.mrb[0].mxu0
  %v229 = vadd.f32 %v51, %v228
  %v230 = vpop.f32.mrb[0].mxu0
  %231 = vmatprep.mubr.f32.mxu0 0.0
  %232 = vmatmul.mubr.f32.gmra.mrb[0].mxu0 %v94
  %v233 = vpop.f32.mrb[0].mxu0
  %v234 = vadd.f32 %v51, %v233
  %v235 = vpop.f32.mrb[0].mxu0
  %236 = vmatprep.mubr.f32.mxu0 0.0
  %237 = vmatmul.mubr.f32.gmra.mrb[0].mxu0 %v97
  %v238 = vpop.f32.mrb[0].mxu0
  %v239 = vadd.f32 %v51, %v238
  %v240 = vpop.f32.mrb[0].mxu0
  %241 = vmatprep.mubr.f32.mxu0 0.0
  %242 = vmatmul.mubr.f32.gmra.mrb[0].mxu0 %v100
  %v243 = vpop.f32.mrb[0].mxu0
  %v244 = vadd.f32 %v51, %v243
  %v245 = vpop.f32.mrb[0].mxu0
  %246 = vdwg.mxu0
  %v247 = vmax.f32 %v169, 0.0
  %v248 = vmax.f32 %v174, 0.0
  %v249 = vmax.f32 %v179, 0.0
  %v250 = vmax.f32 %v184, 0.0
  %v251 = vmax.f32 %v189, 0.0
  %v252 = vmax.f32 %v194, 0.0
  %v253 = vmax.f32 %v199, 0.0
  %v254 = vmax.f32 %v204, 0.0
  %v255 = vmax.f32 %v209, 0.0
  %v256 = vmax.f32 %v214, 0.0
  %v257 = vmax.f32 %v219, 0.0
  %v258 = vmax.f32 %v224, 0.0
  %v259 = vmax.f32 %v229, 0.0
  %v260 = vmax.f32 %v234, 0.0
  %v261 = vmax.f32 %v239, 0.0
  %v262 = vmax.f32 %v244, 0.0
  %v263 = vld [vmem:[%s3] sm:$0xff]
  %v264 = vld [vmem:[%s3 + $0x8] sm:$0xff]
  %v265 = vld [vmem:[%s3 + $0x10] sm:$0xff]
  %v266 = vld [vmem:[%s3 + $0x18] sm:$0xff]
  %v267 = vld [vmem:[%s3 + $0x20] sm:$0xff]
  %v268 = vld [vmem:[%s3 + $0x28] sm:$0xff]
  %v269 = vld [vmem:[%s3 + $0x30] sm:$0xff]
  %v270 = vld [vmem:[%s3 + $0x38] sm:$0xff]
  %v271 = vld [vmem:[%s3 + $0x40] sm:$0xff]
  %v272 = vld [vmem:[%s3 + $0x48] sm:$0xff]
  %v273 = vld [vmem:[%s3 + $0x50] sm:$0xff]
  %v274 = vld [vmem:[%s3 + $0x58] sm:$0xff]
  %v275 = vld [vmem:[%s3 + $0x60] sm:$0xff]
  %v276 = vld [vmem:[%s3 + $0x68] sm:$0xff]
  %v277 = vld [vmem:[%s3 + $0x70] sm:$0xff]
  %v278 = vld [vmem:[%s3 + $0x78] sm:$0xff]
  %v279 = vld [vmem:[%s4] sm:$0x1]
  %v281 = vlaneseq
  %v282 = vshrl.u32 %v281, 7
  %v283 = vsub.s32 0, %v282
  %v284 = vrot.slane %v279, %v283
  %286 = vmatprep.subr.mxu0 0.0
  %287 = vmatpush1.msra.mxu0 %v263
  %288 = vmatprep.subr.mxu0 0.0
  %289 = vmatpush1.msra.mxu0 %v264
  %290 = vmatprep.subr.mxu0 0.0
  %291 = vmatpush1.msra.mxu0 %v265
  %292 = vmatprep.subr.mxu0 0.0
  %293 = vmatpush1.msra.mxu0 %v266
  %294 = vmatprep.subr.mxu0 0.0
  %295 = vmatpush1.msra.mxu0 %v267
  %296 = vmatprep.subr.mxu0 0.0
  %297 = vmatpush1.msra.mxu0 %v268
  %298 = vmatprep.subr.mxu0 0.0
  %299 = vmatpush1.msra.mxu0 %v269
  %300 = vmatprep.subr.mxu0 0.0
  %301 = vmatpush1.msra.mxu0 %v270
  %302 = vmatprep.subr.mxu0 0.0
  %303 = vmatpush1.msra.mxu0 %v271
  %304 = vmatprep.subr.mxu0 0.0
  %305 = vmatpush1.msra.mxu0 %v272
  %306 = vmatprep.subr.mxu0 0.0
  %307 = vmatpush1.msra.mxu0 %v273
  %308 = vmatprep.subr.mxu0 0.0
  %309 = vmatpush1.msra.mxu0 %v274
  %310 = vmatprep.subr.mxu0 0.0
  %311 = vmatpush1.msra.mxu0 %v275
  %312 = vmatprep.subr.mxu0 0.0
  %313 = vmatpush1.msra.mxu0 %v276
  %314 = vmatprep.subr.mxu0 0.0
  %315 = vmatpush1.msra.mxu0 %v277
  %316 = vmatprep.subr.mxu0 0.0
  %317 = vmatpush1.msra.mxu0 %v278
  %318 = vmatprep.subr.mxu0 0.0
  %319 = vmatpush1.msra.mxu0 0.0
  %320 = vmatprep.subr.mxu0 0.0
  %321 = vmatpush1.msra.mxu0 0.0
  %322 = vmatprep.subr.mxu0 0.0
  %323 = vmatpush1.msra.mxu0 0.0
  %324 = vmatprep.subr.mxu0 0.0
  %325 = vmatpush1.msra.mxu0 0.0
  %326 = vmatprep.subr.mxu0 0.0
  %327 = vmatpush1.msra.mxu0 0.0
  %328 = vmatprep.subr.mxu0 0.0
  %329 = vmatpush1.msra.mxu0 0.0
  %330 = vmatprep.subr.mxu0 0.0
  %331 = vmatpush1.msra.mxu0 0.0
  %332 = vmatprep.subr.mxu0 0.0
  %333 = vmatpush1.msra.mxu0 0.0
  %334 = vmatprep.subr.mxu0 0.0
  %335 = vmatpush1.msra.mxu0 0.0
  %336 = vmatprep.subr.mxu0 0.0
  %337 = vmatpush1.msra.mxu0 0.0
  %338 = vmatprep.subr.mxu0 0.0
  %339 = vmatpush1.msra.mxu0 0.0
  %340 = vmatprep.subr.mxu0 0.0
  %341 = vmatpush1.msra.mxu0 0.0
  %342 = vmatprep.subr.mxu0 0.0
  %343 = vmatpush1.msra.mxu0 0.0
  %344 = vmatprep.subr.mxu0 0.0
  %345 = vmatpush1.msra.mxu0 0.0
  %346 = vmatprep.subr.mxu0 0.0
  %347 = vmatpush1.msra.mxu0 0.0
  %348 = vmatprep.subr.mxu0 0.0
  %349 = vmatpush1.msra.mxu0 0.0
  %350 = vmatprep.mubr.f32.mxu0 0.0
  %351 = vmatmul.mubr.f32.gmra.mrb[0].mxu0 %v247
  %v352 = vpop.f32.mrb[0].mxu0
  %v353 = vadd.f32 %v284, %v352
  %v354 = vpop.f32.mrb[0].mxu0
  %355 = vmatprep.mubr.f32.mxu0 0.0
  %356 = vmatmul.mubr.f32.gmra.mrb[0].mxu0 %v248
  %v357 = vpop.f32.mrb[0].mxu0
  %v358 = vadd.f32 %v284, %v357
  %v359 = vpop.f32.mrb[0].mxu0
  %360 = vmatprep.mubr.f32.mxu0 0.0
  %361 = vmatmul.mubr.f32.gmra.mrb[0].mxu0 %v249
  %v362 = vpop.f32.mrb[0].mxu0
  %v363 = vadd.f32 %v284, %v362
  %v364 = vpop.f32.mrb[0].mxu0
  %365 = vmatprep.mubr.f32.mxu0 0.0
  %366 = vmatmul.mubr.f32.gmra.mrb[0].mxu0 %v250
  %v367 = vpop.f32.mrb[0].mxu0
  %v368 = vadd.f32 %v284, %v367
  %v369 = vpop.f32.mrb[0].mxu0
  %370 = vmatprep.mubr.f32.mxu0 0.0
  %371 = vmatmul.mubr.f32.gmra.mrb[0].mxu0 %v251
  %v372 = vpop.f32.mrb[0].mxu0
  %v373 = vadd.f32 %v284, %v372
  %v374 = vpop.f32.mrb[0].mxu0
  %375 = vmatprep.mubr.f32.mxu0 0.0
  %376 = vmatmul.mubr.f32.gmra.mrb[0].mxu0 %v252
  %v377 = vpop.f32.mrb[0].mxu0
  %v378 = vadd.f32 %v284, %v377
  %v379 = vpop.f32.mrb[0].mxu0
  %380 = vmatprep.mubr.f32.mxu0 0.0
  %381 = vmatmul.mubr.f32.gmra.mrb[0].mxu0 %v253
  %v382 = vpop.f32.mrb[0].mxu0
  %v383 = vadd.f32 %v284, %v382
  %v384 = vpop.f32.mrb[0].mxu0
  %385 = vmatprep.mubr.f32.mxu0 0.0
  %386 = vmatmul.mubr.f32.gmra.mrb[0].mxu0 %v254
  %v387 = vpop.f32.mrb[0].mxu0
  %v388 = vadd.f32 %v284, %v387
  %v389 = vpop.f32.mrb[0].mxu0
  %390 = vmatprep.mubr.f32.mxu0 0.0
  %391 = vmatmul.mubr.f32.gmra.mrb[0].mxu0 %v255
  %v392 = vpop.f32.mrb[0].mxu0
  %v393 = vadd.f32 %v284, %v392
  %v394 = vpop.f32.mrb[0].mxu0
  %395 = vmatprep.mubr.f32.mxu0 0.0
  %396 = vmatmul.mubr.f32.gmra.mrb[0].mxu0 %v256
  %v397 = vpop.f32.mrb[0].mxu0
  %v398 = vadd.f32 %v284, %v397
  %v399 = vpop.f32.mrb[0].mxu0
  %400 = vmatprep.mubr.f32.mxu0 0.0
  %401 = vmatmul.mubr.f32.gmra.mrb[0].mxu0 %v257
  %v402 = vpop.f32.mrb[0].mxu0
  %v403 = vadd.f32 %v284, %v402
  %v404 = vpop.f32.mrb[0].mxu0
  %405 = vmatprep.mubr.f32.mxu0 0.0
  %406 = vmatmul.mubr.f32.gmra.mrb[0].mxu0 %v258
  %v407 = vpop.f32.mrb[0].mxu0
  %v408 = vadd.f32 %v284, %v407
  %v409 = vpop.f32.mrb[0].mxu0
  %410 = vmatprep.mubr.f32.mxu0 0.0
  %411 = vmatmul.mubr.f32.gmra.mrb[0].mxu0 %v259
  %v412 = vpop.f32.mrb[0].mxu0
  %v413 = vadd.f32 %v284, %v412
  %v414 = vpop.f32.mrb[0].mxu0
  %415 = vmatprep.mubr.f32.mxu0 0.0
  %416 = vmatmul.mubr.f32.gmra.mrb[0].mxu0 %v260
  %v417 = vpop.f32.mrb[0].mxu0
  %v418 = vadd.f32 %v284, %v417
  %v419 = vpop.f32.mrb[0].mxu0
  %420 = vmatprep.mubr.f32.mxu0 0.0
  %421 = vmatmul.mubr.f32.gmra.mrb[0].mxu0 %v261
  %v422 = vpop.f32.mrb[0].mxu0
  %v423 = vadd.f32 %v284, %v422
  %v424 = vpop.f32.mrb[0].mxu0
  %425 = vmatprep.mubr.f32.mxu0 0.0
  %426 = vmatmul.mubr.f32.gmra.mrb[0].mxu0 %v262
  %v427 = vpop.f32.mrb[0].mxu0
  %v428 = vadd.f32 %v284, %v427
  %v429 = vpop.f32.mrb[0].mxu0
  %430 = vdwg.mxu0
  %v431 = vmax.f32 %v353, 0.0
  %v432 = vmax.f32 %v358, 0.0
  %v433 = vmax.f32 %v363, 0.0
  %v434 = vmax.f32 %v368, 0.0
  %v435 = vmax.f32 %v373, 0.0
  %v436 = vmax.f32 %v378, 0.0
  %v437 = vmax.f32 %v383, 0.0
  %v438 = vmax.f32 %v388, 0.0
  %v439 = vmax.f32 %v393, 0.0
  %v440 = vmax.f32 %v398, 0.0
  %v441 = vmax.f32 %v403, 0.0
  %v442 = vmax.f32 %v408, 0.0
  %v443 = vmax.f32 %v413, 0.0
  %v444 = vmax.f32 %v418, 0.0
  %v445 = vmax.f32 %v423, 0.0
  %v446 = vmax.f32 %v428, 0.0
  %v447 = vld [vmem:[%s5] sm:$0xff]
  %v448 = vld [vmem:[%s5 + $0x8] sm:$0xff]
  %v449 = vld [vmem:[%s5 + $0x10] sm:$0xff]
  %v450 = vld [vmem:[%s5 + $0x18] sm:$0xff]
  %v451 = vld [vmem:[%s5 + $0x20] sm:$0xff]
  %v452 = vld [vmem:[%s5 + $0x28] sm:$0xff]
  %v453 = vld [vmem:[%s5 + $0x30] sm:$0xff]
  %v454 = vld [vmem:[%s5 + $0x38] sm:$0xff]
  %v455 = vld [vmem:[%s5 + $0x40] sm:$0xff]
  %v456 = vld [vmem:[%s5 + $0x48] sm:$0xff]
  %v457 = vld [vmem:[%s5 + $0x50] sm:$0xff]
  %v458 = vld [vmem:[%s5 + $0x58] sm:$0xff]
  %v459 = vld [vmem:[%s5 + $0x60] sm:$0xff]
  %v460 = vld [vmem:[%s5 + $0x68] sm:$0xff]
  %v461 = vld [vmem:[%s5 + $0x70] sm:$0xff]
  %v462 = vld [vmem:[%s5 + $0x78] sm:$0xff]
  %v463 = vld [vmem:[%s6] sm:$0x1]
  %v465 = vlaneseq
  %v466 = vshrl.u32 %v465, 7
  %v467 = vsub.s32 0, %v466
  %v468 = vrot.slane %v463, %v467
  %470 = vmatprep.subr.mxu0 0.0
  %471 = vmatpush1.msra.mxu0 %v447
  %472 = vmatprep.subr.mxu0 0.0
  %473 = vmatpush1.msra.mxu0 %v448
  %474 = vmatprep.subr.mxu0 0.0
  %475 = vmatpush1.msra.mxu0 %v449
  %476 = vmatprep.subr.mxu0 0.0
  %477 = vmatpush1.msra.mxu0 %v450
  %478 = vmatprep.subr.mxu0 0.0
  %479 = vmatpush1.msra.mxu0 %v451
  %480 = vmatprep.subr.mxu0 0.0
  %481 = vmatpush1.msra.mxu0 %v452
  %482 = vmatprep.subr.mxu0 0.0
  %483 = vmatpush1.msra.mxu0 %v453
  %484 = vmatprep.subr.mxu0 0.0
  %485 = vmatpush1.msra.mxu0 %v454
  %486 = vmatprep.subr.mxu0 0.0
  %487 = vmatpush1.msra.mxu0 %v455
  %488 = vmatprep.subr.mxu0 0.0
  %489 = vmatpush1.msra.mxu0 %v456
  %490 = vmatprep.subr.mxu0 0.0
  %491 = vmatpush1.msra.mxu0 %v457
  %492 = vmatprep.subr.mxu0 0.0
  %493 = vmatpush1.msra.mxu0 %v458
  %494 = vmatprep.subr.mxu0 0.0
  %495 = vmatpush1.msra.mxu0 %v459
  %496 = vmatprep.subr.mxu0 0.0
  %497 = vmatpush1.msra.mxu0 %v460
  %498 = vmatprep.subr.mxu0 0.0
  %499 = vmatpush1.msra.mxu0 %v461
  %500 = vmatprep.subr.mxu0 0.0
  %501 = vmatpush1.msra.mxu0 %v462
  %502 = vmatprep.subr.mxu0 0.0
  %503 = vmatpush1.msra.mxu0 0.0
  %504 = vmatprep.subr.mxu0 0.0
  %505 = vmatpush1.msra.mxu0 0.0
  %506 = vmatprep.subr.mxu0 0.0
  %507 = vmatpush1.msra.mxu0 0.0
  %508 = vmatprep.subr.mxu0 0.0
  %509 = vmatpush1.msra.mxu0 0.0
  %510 = vmatprep.subr.mxu0 0.0
  %511 = vmatpush1.msra.mxu0 0.0
  %512 = vmatprep.subr.mxu0 0.0
  %513 = vmatpush1.msra.mxu0 0.0
  %514 = vmatprep.subr.mxu0 0.0
  %515 = vmatpush1.msra.mxu0 0.0
  %516 = vmatprep.subr.mxu0 0.0
  %517 = vmatpush1.msra.mxu0 0.0
  %518 = vmatprep.subr.mxu0 0.0
  %519 = vmatpush1.msra.mxu0 0.0
  %520 = vmatprep.subr.mxu0 0.0
  %521 = vmatpush1.msra.mxu0 0.0
  %522 = vmatprep.subr.mxu0 0.0
  %523 = vmatpush1.msra.mxu0 0.0
  %524 = vmatprep.subr.mxu0 0.0
  %525 = vmatpush1.msra.mxu0 0.0
  %526 = vmatprep.subr.mxu0 0.0
  %527 = vmatpush1.msra.mxu0 0.0
  %528 = vmatprep.subr.mxu0 0.0
  %529 = vmatpush1.msra.mxu0 0.0
  %530 = vmatprep.subr.mxu0 0.0
  %531 = vmatpush1.msra.mxu0 0.0
  %532 = vmatprep.subr.mxu0 0.0
  %533 = vmatpush1.msra.mxu0 0.0
  %534 = vmatprep.mubr.f32.mxu0 0.0
  %535 = vmatmul.mubr.f32.gmra.mrb[0].mxu0 %v431
  %v536 = vpop.f32.mrb[0].mxu0
  %v537 = vadd.f32 %v468, %v536
  %v538 = vpop.f32.mrb[0].mxu0
  %539 = vmatprep.mubr.f32.mxu0 0.0
  %540 = vmatmul.mubr.f32.gmra.mrb[0].mxu0 %v432
  %v541 = vpop.f32.mrb[0].mxu0
  %v542 = vadd.f32 %v468, %v541
  %v543 = vpop.f32.mrb[0].mxu0
  %544 = vmatprep.mubr.f32.mxu0 0.0
  %545 = vmatmul.mubr.f32.gmra.mrb[0].mxu0 %v433
  %v546 = vpop.f32.mrb[0].mxu0
  %v547 = vadd.f32 %v468, %v546
  %v548 = vpop.f32.mrb[0].mxu0
  %549 = vmatprep.mubr.f32.mxu0 0.0
  %550 = vmatmul.mubr.f32.gmra.mrb[0].mxu0 %v434
  %v551 = vpop.f32.mrb[0].mxu0
  %v552 = vadd.f32 %v468, %v551
  %v553 = vpop.f32.mrb[0].mxu0
  %554 = vmatprep.mubr.f32.mxu0 0.0
  %555 = vmatmul.mubr.f32.gmra.mrb[0].mxu0 %v435
  %v556 = vpop.f32.mrb[0].mxu0
  %v557 = vadd.f32 %v468, %v556
  %v558 = vpop.f32.mrb[0].mxu0
  %559 = vmatprep.mubr.f32.mxu0 0.0
  %560 = vmatmul.mubr.f32.gmra.mrb[0].mxu0 %v436
  %v561 = vpop.f32.mrb[0].mxu0
  %v562 = vadd.f32 %v468, %v561
  %v563 = vpop.f32.mrb[0].mxu0
  %564 = vmatprep.mubr.f32.mxu0 0.0
  %565 = vmatmul.mubr.f32.gmra.mrb[0].mxu0 %v437
  %v566 = vpop.f32.mrb[0].mxu0
  %v567 = vadd.f32 %v468, %v566
  %v568 = vpop.f32.mrb[0].mxu0
  %569 = vmatprep.mubr.f32.mxu0 0.0
  %570 = vmatmul.mubr.f32.gmra.mrb[0].mxu0 %v438
  %v571 = vpop.f32.mrb[0].mxu0
  %v572 = vadd.f32 %v468, %v571
  %v573 = vpop.f32.mrb[0].mxu0
  %574 = vmatprep.mubr.f32.mxu0 0.0
  %575 = vmatmul.mubr.f32.gmra.mrb[0].mxu0 %v439
  %v576 = vpop.f32.mrb[0].mxu0
  %v577 = vadd.f32 %v468, %v576
  %v578 = vpop.f32.mrb[0].mxu0
  %579 = vmatprep.mubr.f32.mxu0 0.0
  %580 = vmatmul.mubr.f32.gmra.mrb[0].mxu0 %v440
  %v581 = vpop.f32.mrb[0].mxu0
  %v582 = vadd.f32 %v468, %v581
  %v583 = vpop.f32.mrb[0].mxu0
  %584 = vmatprep.mubr.f32.mxu0 0.0
  %585 = vmatmul.mubr.f32.gmra.mrb[0].mxu0 %v441
  %v586 = vpop.f32.mrb[0].mxu0
  %v587 = vadd.f32 %v468, %v586
  %v588 = vpop.f32.mrb[0].mxu0
  %589 = vmatprep.mubr.f32.mxu0 0.0
  %590 = vmatmul.mubr.f32.gmra.mrb[0].mxu0 %v442
  %v591 = vpop.f32.mrb[0].mxu0
  %v592 = vadd.f32 %v468, %v591
  %v593 = vpop.f32.mrb[0].mxu0
  %594 = vmatprep.mubr.f32.mxu0 0.0
  %595 = vmatmul.mubr.f32.gmra.mrb[0].mxu0 %v443
  %v596 = vpop.f32.mrb[0].mxu0
  %v597 = vadd.f32 %v468, %v596
  %v598 = vpop.f32.mrb[0].mxu0
  %599 = vmatprep.mubr.f32.mxu0 0.0
  %600 = vmatmul.mubr.f32.gmra.mrb[0].mxu0 %v444
  %v601 = vpop.f32.mrb[0].mxu0
  %v602 = vadd.f32 %v468, %v601
  %v603 = vpop.f32.mrb[0].mxu0
  %604 = vmatprep.mubr.f32.mxu0 0.0
  %605 = vmatmul.mubr.f32.gmra.mrb[0].mxu0 %v445
  %v606 = vpop.f32.mrb[0].mxu0
  %v607 = vadd.f32 %v468, %v606
  %v608 = vpop.f32.mrb[0].mxu0
  %609 = vmatprep.mubr.f32.mxu0 0.0
  %610 = vmatmul.mubr.f32.gmra.mrb[0].mxu0 %v446
  %v611 = vpop.f32.mrb[0].mxu0
  %v612 = vadd.f32 %v468, %v611
  %v613 = vpop.f32.mrb[0].mxu0
  %614 = vdwg.mxu0
  %615 = vmax.xlane.f32.xlu0 %v537
  %v616 = vpop.xlane.xlu0 %615
  %617 = vmax.xlane.f32.xlu0 %v542
  %v618 = vpop.xlane.xlu0 %617
  %619 = vmax.xlane.f32.xlu0 %v547
  %v620 = vpop.xlane.xlu0 %619
  %621 = vmax.xlane.f32.xlu0 %v552
  %v622 = vpop.xlane.xlu0 %621
  %623 = vmax.xlane.f32.xlu0 %v557
  %v624 = vpop.xlane.xlu0 %623
  %625 = vmax.xlane.f32.xlu0 %v562
  %v626 = vpop.xlane.xlu0 %625
  %627 = vmax.xlane.f32.xlu0 %v567
  %v628 = vpop.xlane.xlu0 %627
  %629 = vmax.xlane.f32.xlu0 %v572
  %v630 = vpop.xlane.xlu0 %629
  %631 = vmax.xlane.f32.xlu0 %v577
  %v632 = vpop.xlane.xlu0 %631
  %633 = vmax.xlane.f32.xlu0 %v582
  %v634 = vpop.xlane.xlu0 %633
  %635 = vmax.xlane.f32.xlu0 %v587
  %v636 = vpop.xlane.xlu0 %635
  %637 = vmax.xlane.f32.xlu0 %v592
  %v638 = vpop.xlane.xlu0 %637
  %639 = vmax.xlane.f32.xlu0 %v597
  %v640 = vpop.xlane.xlu0 %639
  %641 = vmax.xlane.f32.xlu0 %v602
  %v642 = vpop.xlane.xlu0 %641
  %643 = vmax.xlane.f32.xlu0 %v607
  %v644 = vpop.xlane.xlu0 %643
  %645 = vmax.xlane.f32.xlu0 %v612
  %v646 = vpop.xlane.xlu0 %645
  %v647 = vsub.f32 %v537, %v616
  %v648 = vsub.f32 %v542, %v618
  %v649 = vsub.f32 %v547, %v620
  %v650 = vsub.f32 %v552, %v622
  %v651 = vsub.f32 %v557, %v624
  %v652 = vsub.f32 %v562, %v626
  %v653 = vsub.f32 %v567, %v628
  %v654 = vsub.f32 %v572, %v630
  %v655 = vsub.f32 %v577, %v632
  %v656 = vsub.f32 %v582, %v634
  %v657 = vsub.f32 %v587, %v636
  %v658 = vsub.f32 %v592, %v638
  %v659 = vsub.f32 %v597, %v640
  %v660 = vsub.f32 %v602, %v642
  %v661 = vsub.f32 %v607, %v644
  %v662 = vsub.f32 %v612, %v646
  %v663 = vmul.f32 %v647, 1.442695
  %v664 = vpow.pop %v663
  %v665 = vmul.f32 %v648, 1.442695
  %v666 = vpow.pop %v665
  %v667 = vmul.f32 %v649, 1.442695
  %v668 = vpow.pop %v667
  %v669 = vmul.f32 %v650, 1.442695
  %v670 = vpow.pop %v669
  %v671 = vmul.f32 %v651, 1.442695
  %v672 = vpow.pop %v671
  %v673 = vmul.f32 %v652, 1.442695
  %v674 = vpow.pop %v673
  %v675 = vmul.f32 %v653, 1.442695
  %v676 = vpow.pop %v675
  %v677 = vmul.f32 %v654, 1.442695
  %v678 = vpow.pop %v677
  %v679 = vmul.f32 %v655, 1.442695
  %v680 = vpow.pop %v679
  %v681 = vmul.f32 %v656, 1.442695
  %v682 = vpow.pop %v681
  %v683 = vmul.f32 %v657, 1.442695
  %v684 = vpow.pop %v683
  %v685 = vmul.f32 %v658, 1.442695
  %v686 = vpow.pop %v685
  %v687 = vmul.f32 %v659, 1.442695
  %v688 = vpow.pop %v687
  %v689 = vmul.f32 %v660, 1.442695
  %v690 = vpow.pop %v689
  %v691 = vmul.f32 %v661, 1.442695
  %v692 = vpow.pop %v691
  %v693 = vmul.f32 %v662, 1.442695
  %v694 = vpow.pop %v693
  %695 = vadd.xlane.f32.xlu0 %v664
  %v696 = vpop.xlane.xlu0 %695
  %697 = vadd.xlane.f32.xlu0 %v666
  %v698 = vpop.xlane.xlu0 %697
  %699 = vadd.xlane.f32.xlu0 %v668
  %v700 = vpop.xlane.xlu0 %699
  %701 = vadd.xlane.f32.xlu0 %v670
  %v702 = vpop.xlane.xlu0 %701
  %703 = vadd.xlane.f32.xlu0 %v672
  %v704 = vpop.xlane.xlu0 %703
  %705 = vadd.xlane.f32.xlu0 %v674
  %v706 = vpop.xlane.xlu0 %705
  %707 = vadd.xlane.f32.xlu0 %v676
  %v708 = vpop.xlane.xlu0 %707
  %709 = vadd.xlane.f32.xlu0 %v678
  %v710 = vpop.xlane.xlu0 %709
  %711 = vadd.xlane.f32.xlu0 %v680
  %v712 = vpop.xlane.xlu0 %711
  %713 = vadd.xlane.f32.xlu0 %v682
  %v714 = vpop.xlane.xlu0 %713
  %715 = vadd.xlane.f32.xlu0 %v684
  %v716 = vpop.xlane.xlu0 %715
  %717 = vadd.xlane.f32.xlu0 %v686
  %v718 = vpop.xlane.xlu0 %717
  %719 = vadd.xlane.f32.xlu0 %v688
  %v720 = vpop.xlane.xlu0 %719
  %721 = vadd.xlane.f32.xlu0 %v690
  %v722 = vpop.xlane.xlu0 %721
  %723 = vadd.xlane.f32.xlu0 %v692
  %v724 = vpop.xlane.xlu0 %723
  %725 = vadd.xlane.f32.xlu0 %v694
  %v726 = vpop.xlane.xlu0 %725
  %v727 = vrcp.pop %v696
  %v728 = vmul.f32 1.0, %v727
  %v729 = vrcp.pop %v698
  %v730 = vmul.f32 1.0, %v729
  %v731 = vrcp.pop %v700
  %v732 = vmul.f32 1.0, %v731
  %v733 = vrcp.pop %v702
  %v734 = vmul.f32 1.0, %v733
  %v735 = vrcp.pop %v704
  %v736 = vmul.f32 1.0, %v735
  %v737 = vrcp.pop %v706
  %v738 = vmul.f32 1.0, %v737
  %v739 = vrcp.pop %v708
  %v740 = vmul.f32 1.0, %v739
  %v741 = vrcp.pop %v710
  %v742 = vmul.f32 1.0, %v741
  %v743 = vrcp.pop %v712
  %v744 = vmul.f32 1.0, %v743
  %v745 = vrcp.pop %v714
  %v746 = vmul.f32 1.0, %v745
  %v747 = vrcp.pop %v716
  %v748 = vmul.f32 1.0, %v747
  %v749 = vrcp.pop %v718
  %v750 = vmul.f32 1.0, %v749
  %v751 = vrcp.pop %v720
  %v752 = vmul.f32 1.0, %v751
  %v753 = vrcp.pop %v722
  %v754 = vmul.f32 1.0, %v753
  %v755 = vrcp.pop %v724
  %v756 = vmul.f32 1.0, %v755
  %v757 = vrcp.pop %v726
  %v758 = vmul.f32 1.0, %v757
  %v759 = vmul.f32 %v664, %v728
  %v760 = vmul.f32 %v666, %v730
  %v761 = vmul.f32 %v668, %v732
  %v762 = vmul.f32 %v670, %v734
  %v763 = vmul.f32 %v672, %v736
  %v764 = vmul.f32 %v674, %v738
  %v765 = vmul.f32 %v676, %v740
  %v766 = vmul.f32 %v678, %v742
  %v767 = vmul.f32 %v680, %v744
  %v768 = vmul.f32 %v682, %v746
  %v769 = vmul.f32 %v684, %v748
  %v770 = vmul.f32 %v686, %v750
  %v771 = vmul.f32 %v688, %v752
  %v772 = vmul.f32 %v690, %v754
  %v773 = vmul.f32 %v692, %v756
  %v774 = vmul.f32 %v694, %v758
  %776 = vrot.lane.b32.xlu0 %v759, 2048
  %v777 = vpop.permute.xlu0 %776
  %s779 = sor.u32 2048, 64
  %780 = vrot.lane.b32.xlu0 %v760, %s779
  %v781 = vpop.permute.xlu0 %780
  %783 = vrot.lane.b32.xlu0 %v761, 2048
  %v784 = vpop.permute.xlu0 %783
  %s786 = sor.u32 2048, 64
  %787 = vrot.lane.b32.xlu0 %v762, %s786
  %v788 = vpop.permute.xlu0 %787
  %790 = vrot.lane.b32.xlu0 %v763, 2048
  %v791 = vpop.permute.xlu0 %790
  %s793 = sor.u32 2048, 64
  %794 = vrot.lane.b32.xlu0 %v764, %s793
  %v795 = vpop.permute.xlu0 %794
  %797 = vrot.lane.b32.xlu0 %v765, 2048
  %v798 = vpop.permute.xlu0 %797
  %s800 = sor.u32 2048, 64
  %801 = vrot.lane.b32.xlu0 %v766, %s800
  %v802 = vpop.permute.xlu0 %801
  %804 = vrot.lane.b32.xlu0 %v767, 2048
  %v805 = vpop.permute.xlu0 %804
  %s807 = sor.u32 2048, 64
  %808 = vrot.lane.b32.xlu0 %v768, %s807
  %v809 = vpop.permute.xlu0 %808
  %811 = vrot.lane.b32.xlu0 %v769, 2048
  %v812 = vpop.permute.xlu0 %811
  %s814 = sor.u32 2048, 64
  %815 = vrot.lane.b32.xlu0 %v770, %s814
  %v816 = vpop.permute.xlu0 %815
  %818 = vrot.lane.b32.xlu0 %v771, 2048
  %v819 = vpop.permute.xlu0 %818
  %s821 = sor.u32 2048, 64
  %822 = vrot.lane.b32.xlu0 %v772, %s821
  %v823 = vpop.permute.xlu0 %822
  %825 = vrot.lane.b32.xlu0 %v773, 2048
  %v826 = vpop.permute.xlu0 %825
  %s828 = sor.u32 2048, 64
  %829 = vrot.lane.b32.xlu0 %v774, %s828
  %v830 = vpop.permute.xlu0 %829
  %v831 = vadd.f32 %v777, %v781
  %v832 = vrot.slane %v831, 4
  %v833 = vadd.f32 %v831, %v832
  %v834 = vrot.slane %v833, 2
  %v835 = vadd.f32 %v833, %v834
  %v836 = vrot.slane %v835, 1
  %v837 = vadd.f32 %v835, %v836
  %v838 = vadd.f32 %v784, %v788
  %v839 = vrot.slane %v838, 4
  %v840 = vadd.f32 %v838, %v839
  %v841 = vrot.slane %v840, 2
  %v842 = vadd.f32 %v840, %v841
  %v843 = vrot.slane %v842, 1
  %v844 = vadd.f32 %v842, %v843
  %v845 = vadd.f32 %v791, %v795
  %v846 = vrot.slane %v845, 4
  %v847 = vadd.f32 %v845, %v846
  %v848 = vrot.slane %v847, 2
  %v849 = vadd.f32 %v847, %v848
  %v850 = vrot.slane %v849, 1
  %v851 = vadd.f32 %v849, %v850
  %v852 = vadd.f32 %v798, %v802
  %v853 = vrot.slane %v852, 4
  %v854 = vadd.f32 %v852, %v853
  %v855 = vrot.slane %v854, 2
  %v856 = vadd.f32 %v854, %v855
  %v857 = vrot.slane %v856, 1
  %v858 = vadd.f32 %v856, %v857
  %v859 = vadd.f32 %v805, %v809
  %v860 = vrot.slane %v859, 4
  %v861 = vadd.f32 %v859, %v860
  %v862 = vrot.slane %v861, 2
  %v863 = vadd.f32 %v861, %v862
  %v864 = vrot.slane %v863, 1
  %v865 = vadd.f32 %v863, %v864
  %v866 = vadd.f32 %v812, %v816
  %v867 = vrot.slane %v866, 4
  %v868 = vadd.f32 %v866, %v867
  %v869 = vrot.slane %v868, 2
  %v870 = vadd.f32 %v868, %v869
  %v871 = vrot.slane %v870, 1
  %v872 = vadd.f32 %v870, %v871
  %v873 = vadd.f32 %v819, %v823
  %v874 = vrot.slane %v873, 4
  %v875 = vadd.f32 %v873, %v874
  %v876 = vrot.slane %v875, 2
  %v877 = vadd.f32 %v875, %v876
  %v878 = vrot.slane %v877, 1
  %v879 = vadd.f32 %v877, %v878
  %v880 = vadd.f32 %v826, %v830
  %v881 = vrot.slane %v880, 4
  %v882 = vadd.f32 %v880, %v881
  %v883 = vrot.slane %v882, 2
  %v884 = vadd.f32 %v882, %v883
  %v885 = vrot.slane %v884, 1
  %v886 = vadd.f32 %v884, %v885
  %vm895 = vcmask 1041409
  %v896 = vsel %vm895, %v844, %v837
  %vm897 = vcmask 1042434
  %v898 = vsel %vm897, %v851, %v896
  %vm899 = vcmask 1043459
  %v900 = vsel %vm899, %v858, %v898
  %vm901 = vcmask 1044484
  %v902 = vsel %vm901, %v865, %v900
  %vm903 = vcmask 1045509
  %v904 = vsel %vm903, %v872, %v902
  %vm905 = vcmask 1046534
  %v906 = vsel %vm905, %v879, %v904
  %vm907 = vcmask 1047559
  %v908 = vsel %vm907, %v886, %v906
  %910 = vst [vmem:[%s7] sm:$0xff] %v908
  // Predicated region
  $region30: #{fwd.1} parent=0 // pred_check
    _
  $region31: #{fwd.1} parent=0 // pred_check_branch
    %912 = sbr.rel (0) target = $region33
  $region32: #{fwd.1} parent=0 // pred_region
    _
  $region33: #{fwd.1} parent=0 // pred_fallthru
    _
  // Predicated region
  $region34: #{fwd.1} parent=0 // pred_check
    _
  $region35: #{fwd.1} parent=0 // pred_check_branch
    %914 = sbr.rel (0) target = $region37
  $region36: #{fwd.1} parent=0 // pred_region
    _
  $region37: #{fwd.1} parent=0 // pred_fallthru
    _

</llo_original>
